<compile_context>
chip_gen: v6e
topology: v6e:2x2x1
jax: 0.10.0
libtpu: 0.0.40
codegen_flags: <defaults>
</compile_context>

<pallas_src>
import functools

import jax
import jax.numpy as jnp
from jax import lax
from jax.experimental import pallas as pl
from jax.experimental.pallas import tpu as pltpu

_LANES = 128
_SUBLANES = 8
_MAX_BLOCK_BYTES = 1 << 20          # 1 MiB per input stream per block
_VMEM_LIMIT_BYTES = 32 * 1024 * 1024


def _num_tc_split():
    """2-way grid split only on chips with 2 TensorCores per device (v7x)."""
    try:
        kind = jax.devices()[0].device_kind.lower()
    except Exception:  # pragma: no cover - defensive
        return 1
    return 2 if "v7" in kind else 1


def _focal_elements(x, t, gamma, alpha, hard_targets):
    """Per-element focal loss in f32 (pure jnp; usable in- and out-of-kernel)."""
    # Numerically stable binary_cross_entropy_with_logits (reduction='none'):
    #   logpt = max(x, 0) - x*t + log1p(exp(-|x|))
    e = jnp.exp(-jnp.abs(x))
    softplus = jnp.log1p(e)
    xt_minus_max = x * t - jnp.maximum(x, 0.0)
    logpt = softplus - xt_minus_max

    if hard_targets:
        # ONLY valid for targets exactly in {0, 1}: exp(x*t - max(x,0)) is
        # either 1 or exp(-|x|), so pt reuses `e` and skips a second exp.
        pt = jnp.where(xt_minus_max < 0.0, e, 1.0) / (1.0 + e)
    else:
        pt = jnp.exp(-logpt)

    one_minus_pt = 1.0 - pt
    g = float(gamma)
    if g == int(g) and g >= 0:
        ig = int(g)
        if ig == 0:
            focal = jnp.ones_like(one_minus_pt)
        else:
            focal = one_minus_pt
            for _ in range(ig - 1):
                focal = focal * one_minus_pt
    else:
        focal = jnp.power(one_minus_pt, jnp.float32(g))

    loss = focal * logpt
    if alpha is not None:
        a = jnp.float32(alpha)
        loss = loss * (a * t + (1.0 - a) * (1.0 - t))
    return loss


def _focal_loss_kernel(x_ref, t_ref, out_ref, acc_ref, *, gamma, alpha, rows,
                       block_rows, nk, total_blocks, grid_blocks,
                       hard_targets):
    j = pl.program_id(0)   # TensorCore / half index
    k = pl.program_id(1)   # reduction step within this half
    block_idx = j * nk + k

    @pl.when(k == 0)
    def _init():
        acc_ref[...] = jnp.zeros_like(acc_ref)

    x = x_ref[...].astype(jnp.float32)
    t = t_ref[...].astype(jnp.float32)
    loss = _focal_elements(x, t, gamma, alpha, hard_targets)

    def _reduce_to_acc(v):
        if block_rows % _SUBLANES == 0:
            # Pure VPU elementwise adds over (8,128) slabs; no XLU per step.
            return v.reshape(-1, _SUBLANES, _LANES).sum(axis=0)
        # Only reachable for a single small block (block_rows == rows).
        return v.sum(axis=0, keepdims=True)

    needs_mask = (rows % block_rows) != 0           # static
    has_excess = grid_blocks > total_blocks         # static

    if needs_mask:
        last = total_blocks - 1

        @pl.when(block_idx < last)
        def _plain():
            acc_ref[...] += _reduce_to_acc(loss)

        @pl.when(block_idx == last)
        def _masked():
            # Row-index compare only (no flattened-element index -> no int32
            # overflow for very large n).
            row = lax.broadcasted_iota(jnp.int32, loss.shape, 0)
            valid = (block_idx * block_rows + row) < rows
            acc_ref[...] += _reduce_to_acc(jnp.where(valid, loss, 0.0))
    elif has_excess:
        @pl.when(block_idx < total_blocks)
        def _plain():
            acc_ref[...] += _reduce_to_acc(loss)
    else:
        acc_ref[...] += _reduce_to_acc(loss)

    @pl.when(k == nk - 1)
    def _finalize():
        out_ref[...] = jnp.full((1, 1, 1), jnp.sum(acc_ref[...]), jnp.float32)


def focal_loss(output, target, *, gamma=2.0, alpha=0.25, reduction="mean",
               normalized=False, reduced_threshold=None, hard_targets=False):
    """Pallas implementation of FocalLoss.forward (default-config path).

    `hard_targets=True` is ONLY valid when targets are exactly {0, 1}; it
    elides one exp per element and silently produces wrong results for soft
    labels.
    """
    # TODO(synk): normalized=True, reduced_threshold, and reduction in
    # {'none', 'batchwise_mean'} are not implemented in the kernel.
    assert not normalized and reduced_threshold is None
    assert reduction in ("mean", "sum")

    flat_x = output.reshape(-1)       # native dtype; cast to f32 inside kernel
    flat_t = target.reshape(-1)
    n = flat_x.shape[0]

    rows = n // _LANES
    n_aligned = rows * _LANES
    tail = n - n_aligned

    total = jnp.zeros((), jnp.float32)

    if rows > 0:
        # Free reshape when n is already 128-aligned; for ragged n only the
        # aligned prefix is sliced (no full-stream jnp.pad pass).
        x2 = flat_x[:n_aligned].reshape(rows, _LANES)
        t2 = flat_t[:n_aligned].reshape(rows, _LANES)

        itemsize = max(jnp.dtype(x2.dtype).itemsize, jnp.dtype(t2.dtype).itemsize)
        max_rows = (_MAX_BLOCK_BYTES // (_LANES * itemsize))
        max_rows = max(_SUBLANES, (max_rows // _SUBLANES) * _SUBLANES)

        block_rows = rows if rows <= max_rows else max_rows
        total_blocks = pl.cdiv(rows, block_rows)

        nsplit = _num_tc_split() if total_blocks >= 2 else 1
        nk = pl.cdiv(total_blocks, nsplit)
        grid_blocks = nsplit * nk

        acc_rows = _SUBLANES if block_rows % _SUBLANES == 0 else 1

        kernel = functools.partial(
            _focal_loss_kernel, gamma=gamma, alpha=alpha, rows=rows,
            block_rows=block_rows, nk=nk, total_blocks=total_blocks,
            grid_blocks=grid_blocks, hard_targets=hard_targets)

        def in_map(j, k):
            # Clamp excess grid steps (odd block count on the 2-way split) to
            # the last valid block; the kernel gates their accumulation off.
            return (jnp.minimum(j * nk + k, total_blocks - 1), 0)

        partials = pl.pallas_call(
            kernel,
            out_shape=jax.ShapeDtypeStruct((nsplit, 1, 1), jnp.float32),
            grid_spec=pltpu.PrefetchScalarGridSpec(
                num_scalar_prefetch=0,
                grid=(nsplit, nk),
                in_specs=[
                    pl.BlockSpec((block_rows, _LANES), in_map),
                    pl.BlockSpec((block_rows, _LANES), in_map),
                ],
                out_specs=pl.BlockSpec((1, 1, 1), lambda j, k: (j, 0, 0)),
                scratch_shapes=[pltpu.VMEM((acc_rows, _LANES), jnp.float32)],
            ),
            compiler_params=pltpu.CompilerParams(
                dimension_semantics=("parallel", "arbitrary"),
                vmem_limit_bytes=_VMEM_LIMIT_BYTES),
        )(x2, t2)
        total = total + jnp.sum(partials)

    if tail > 0:
        # <128 leftover elements: one fused jnp pass, no extra HBM round trip
        # over the big streams.
        xt = flat_x[n_aligned:].astype(jnp.float32)
        tt = flat_t[n_aligned:].astype(jnp.float32)
        total = total + jnp.sum(_focal_elements(xt, tt, gamma, alpha,
                                                hard_targets))

    if reduction == "mean":
        total = total / jnp.float32(n)
    return total


def _focal_loss_ref(output, target, gamma=2.0, alpha=0.25, reduction="mean"):
    x = output.astype(jnp.float32)
    t = target.astype(jnp.float32)
    logpt = jnp.maximum(x, 0.0) - x * t + jnp.log1p(jnp.exp(-jnp.abs(x)))
    pt = jnp.exp(-logpt)
    focal = (1.0 - pt) ** gamma
    loss = focal * logpt
    if alpha is not None:
        loss = loss * (alpha * t + (1.0 - alpha) * (1.0 - t))
    return loss.mean() if reduction == "mean" else loss.sum()


if __name__ == "__main__":
    key = jax.random.PRNGKey(0)
    k1, k2, k3, k4, k5, k6 = jax.random.split(key, 6)

    # 1) NCHW logits / {0,1} targets (aligned case: n=2048, single block).
    x = jax.random.normal(k1, (2, 4, 16, 16), dtype=jnp.float32)
    t = (jax.random.uniform(k2, (2, 4, 16, 16)) > 0.5).astype(jnp.float32)
    ref = _focal_loss_ref(x, t)
    out = jax.block_until_ready(focal_loss(x, t, gamma=2.0, alpha=0.25))
    assert jnp.allclose(out, ref, rtol=1e-5, atol=1e-6), (out, ref)

    # 2) Same inputs through the hard-target (exp-elision) path.
    out_hard = jax.block_until_ready(focal_loss(x, t, hard_targets=True))
    assert jnp.allclose(out_hard, ref, rtol=1e-5, atol=1e-6), (out_hard, ref)

    # 3) Ragged bf16 case: aligned-prefix kernel + jnp tail, native dtypes.
    x2 = jax.random.normal(k3, (3, 5, 7, 11), dtype=jnp.bfloat16)
    t2 = (jax.random.uniform(k4, (3, 5, 7, 11)) > 0.5).astype(jnp.float32)
    ref2 = _focal_loss_ref(x2, t2, reduction="sum")
    out2 = jax.block_until_ready(focal_loss(x2, t2, reduction="sum"))
    assert jnp.allclose(out2, ref2, rtol=1e-4, atol=1e-4), (out2, ref2)

    # 4) Multi-block path with a partial (masked) last block + soft targets.
    x3 = jax.random.normal(k5, (300000,), dtype=jnp.float32)
    t3 = jax.random.uniform(k6, (300000,), dtype=jnp.float32)
    ref3 = _focal_loss_ref(x3, t3)
    out3 = jax.block_until_ready(focal_loss(x3, t3))
    assert jnp.allclose(out3, ref3, rtol=1e-4, atol=1e-6), (out3, ref3)

    print("KERNEL_OK")
</pallas_src>

<mosaic_0001>
module attributes {stable_mosaic.version = 11 : i64} {
  func.func @_focal_loss_kernel(%arg0: i32, %arg1: i32, %arg2: memref<16x128xf32, #tpu.memory_space<vmem>>, %arg3: memref<16x128xf32, #tpu.memory_space<vmem>>, %arg4: memref<1x1x1xf32, #tpu.memory_space<vmem>>, %arg5: memref<8x128xf32, #tpu.memory_space<vmem>>) attributes {dimension_semantics = [#tpu.dimension_semantics<parallel>, #tpu.dimension_semantics<arbitrary>], iteration_bounds = array<i64: 1, 1>, scalar_prefetch = 0 : i64, scratch_operands = 1 : i64, tpu.core_type = #tpu.core_type<tc>, window_params = [{transform_indices = @transform_0, window_bounds = array<i64: 16, 128>}, {transform_indices = @transform_1, window_bounds = array<i64: 16, 128>}, {transform_indices = @transform_2, window_bounds = array<i64: 1, 1, 1>}]} {
    %c0_i32 = arith.constant 0 : i32
    %0 = arith.cmpi eq, %arg1, %c0_i32 : i32
    %1 = arith.extui %0 : i1 to i32
    %c0_i32_0 = arith.constant 0 : i32
    %2 = arith.cmpi ne, %1, %c0_i32_0 : i32
    scf.if %2 {
      %cst_18 = arith.constant 0.000000e+00 : f32
      %39 = vector.broadcast %cst_18 : f32 to vector<8x128xf32>
      %c0_19 = arith.constant 0 : index
      %c0_20 = arith.constant 0 : index
      %40 = vector.load %arg5[%c0_19, %c0_20] : memref<8x128xf32, #tpu.memory_space<vmem>>, vector<8x128xf32>
      tpu.vector_store %arg5[%c0_19, %c0_20], %39 {strides = array<i32>} : memref<8x128xf32, #tpu.memory_space<vmem>>, vector<8x128xf32>,
    } else {
    }
    %c0 = arith.constant 0 : index
    %c0_1 = arith.constant 0 : index
    %3 = vector.load %arg2[%c0, %c0_1] : memref<16x128xf32, #tpu.memory_space<vmem>>, vector<16x128xf32>
    %c0_2 = arith.constant 0 : index
    %c0_3 = arith.constant 0 : index
    %4 = vector.load %arg3[%c0_2, %c0_3] : memref<16x128xf32, #tpu.memory_space<vmem>>, vector<16x128xf32>
    %5 = math.absf %3 : vector<16x128xf32>
    %cst = arith.constant 0.000000e+00 : f32
    %6 = vector.broadcast %cst : f32 to vector<16x128xf32>
    %7 = arith.subf %6, %5 : vector<16x128xf32>
    %8 = math.exp %7 : vector<16x128xf32>
    %9 = math.log1p %8 : vector<16x128xf32>
    %10 = arith.mulf %3, %4 : vector<16x128xf32>
    %cst_4 = arith.constant 0.000000e+00 : f32
    %11 = vector.broadcast %cst_4 : f32 to vector<16x128xf32>
    %12 = arith.maximumf %3, %11 : vector<16x128xf32>
    %13 = arith.subf %10, %12 : vector<16x128xf32>
    %14 = arith.subf %9, %13 : vector<16x128xf32>
    %cst_5 = arith.constant 0.000000e+00 : f32
    %15 = vector.broadcast %cst_5 : f32 to vector<16x128xf32>
    %16 = arith.subf %15, %14 : vector<16x128xf32>
    %17 = math.exp %16 : vector<16x128xf32>
    %cst_6 = arith.constant 1.000000e+00 : f32
    %18 = vector.broadcast %cst_6 : f32 to vector<16x128xf32>
    %19 = arith.subf %18, %17 : vector<16x128xf32>
    %20 = arith.mulf %19, %19 : vector<16x128xf32>
    %21 = arith.mulf %20, %14 : vector<16x128xf32>
    %cst_7 = arith.constant 2.500000e-01 : f32
    %22 = vector.broadcast %cst_7 : f32 to vector<16x128xf32>
    %23 = arith.mulf %22, %4 : vector<16x128xf32>
    %cst_8 = arith.constant 1.000000e+00 : f32
    %cst_9 = arith.constant 2.500000e-01 : f32
    %24 = arith.subf %cst_8, %cst_9 : f32
    %cst_10 = arith.constant 1.000000e+00 : f32
    %25 = vector.broadcast %cst_10 : f32 to vector<16x128xf32>
    %26 = arith.subf %25, %4 : vector<16x128xf32>
    %27 = vector.broadcast %24 : f32 to vector<16x128xf32>
    %28 = arith.mulf %27, %26 : vector<16x128xf32>
    %29 = arith.addf %23, %28 : vector<16x128xf32>
    %30 = arith.mulf %21, %29 : vector<16x128xf32>
    %c0_11 = arith.constant 0 : index
    %c0_12 = arith.constant 0 : index
    %31 = vector.load %arg5[%c0_11, %c0_12] : memref<8x128xf32, #tpu.memory_space<vmem>>, vector<8x128xf32>
    %32 = vector.shape_cast %30 : vector<16x128xf32> to vector<2x8x128xf32>
    %cst_13 = arith.constant dense<0.000000e+00> : vector<8x128xf32>
    %33 = vector.multi_reduction <add>, %32, %cst_13 [0] : vector<2x8x128xf32> to vector<8x128xf32>
    %34 = arith.addf %31, %33 : vector<8x128xf32>
    %c0_14 = arith.constant 0 : index
    %c0_15 = arith.constant 0 : index
    %35 = vector.load %arg5[%c0_14, %c0_15] : memref<8x128xf32, #tpu.memory_space<vmem>>, vector<8x128xf32>
    tpu.vector_store %arg5[%c0_14, %c0_15], %34 {strides = array<i32>} : memref<8x128xf32, #tpu.memory_space<vmem>>, vector<8x128xf32>,
    %c0_i32_16 = arith.constant 0 : i32
    %36 = arith.cmpi eq, %arg1, %c0_i32_16 : i32
    %37 = arith.extui %36 : i1 to i32
    %c0_i32_17 = arith.constant 0 : i32
    %38 = arith.cmpi ne, %37, %c0_i32_17 : i32
    scf.if %38 {
      %c0_18 = arith.constant 0 : index
      %c0_19 = arith.constant 0 : index
      %39 = vector.load %arg5[%c0_18, %c0_19] : memref<8x128xf32, #tpu.memory_space<vmem>>, vector<8x128xf32>
      %40 = vector.shape_cast %39 : vector<8x128xf32> to vector<1x8x128xf32>
      %cst_20 = arith.constant dense<0.000000e+00> : vector<1xf32>
      %41 = vector.multi_reduction <add>, %40, %cst_20 [1, 2] : vector<1x8x128xf32> to vector<1xf32>
      %42 = vector.shape_cast %41 : vector<1xf32> to vector<1x1x1xf32>
      %43 = vector.extract %42[0, 0, 0] : f32 from vector<1x1x1xf32>
      %44 = vector.broadcast %43 : f32 to vector<1x1x1xf32>
      %c0_21 = arith.constant 0 : index
      %c0_22 = arith.constant 0 : index
      %c0_23 = arith.constant 0 : index
      %45 = vector.load %arg4[%c0_21, %c0_22, %c0_23] : memref<1x1x1xf32, #tpu.memory_space<vmem>>, vector<1x1x1xf32>
      tpu.vector_store %arg4[%c0_21, %c0_22, %c0_23], %44 {strides = array<i32>} : memref<1x1x1xf32, #tpu.memory_space<vmem>>, vector<1x1x1xf32>,
    } else {
    }
    return
  }
  func.func @transform_0(%arg0: i32, %arg1: i32) -> (i32, i32) {
    %c1_i32 = arith.constant 1 : i32
    %0 = arith.muli %arg0, %c1_i32 : i32
    %1 = arith.addi %0, %arg1 : i32
    %c0_i32 = arith.constant 0 : i32
    %2 = arith.minsi %1, %c0_i32 : i32
    %c0_i32_0 = arith.constant 0 : i32
    %c0_i32_1 = arith.constant 0 : i32
    return %2, %c0_i32_0 : i32, i32
  }
  func.func @transform_1(%arg0: i32, %arg1: i32) -> (i32, i32) {
    %c1_i32 = arith.constant 1 : i32
    %0 = arith.muli %arg0, %c1_i32 : i32
    %1 = arith.addi %0, %arg1 : i32
    %c0_i32 = arith.constant 0 : i32
    %2 = arith.minsi %1, %c0_i32 : i32
    %c0_i32_0 = arith.constant 0 : i32
    %c0_i32_1 = arith.constant 0 : i32
    return %2, %c0_i32_0 : i32, i32
  }
  func.func @transform_2(%arg0: i32, %arg1: i32) -> (i32, i32, i32) {
    %c0_i32 = arith.constant 0 : i32
    %c0_i32_0 = arith.constant 0 : i32
    %c0_i32_1 = arith.constant 0 : i32
    return %arg0, %c0_i32, %c0_i32_0 : i32, i32, i32
  }
}

</mosaic_0001>

<llo_original>
// kernel: tpu_custom_call.1
$region0: #{tpu_custom_call.1}
  #allocation0 [shape = 'u32[]', space=smem, size = 0x4, offset = 0x4, fixed_abs, tag = 'smem constant byte address 0x4 - core index']
  #allocation1 [shape = 'u32[144,128]{1,0:T(1,128)}', space=vmem, size = 0x12000, scoped, tag = 'internal scratch']
  #allocation2 [shape = 'f32[8,128]{1,0:T(8,128)}', space=vmem, size = 0x1000, scoped, tag = 'scratch operand']
  %s0 = inlined_call_operand.hbm [shape: f32[16,128], index: 0, kind: input, shape index: {}]
  %s1 = inlined_call_operand.hbm [shape: f32[16,128], index: 1, kind: input, shape index: {}]
  %s2 = inlined_call_operand.hbm [shape: f32[1,1,1], index: 2, kind: output, shape index: {}]
  %s3 = sld [smem:[#allocation0]]
  $region34: #{tpu_custom_call.1} parent=0
    _
  %s5 = ssub.s32 1, %s3
  %s6 = scalar_select 0, %s5, %s3
  $region1: #{tpu_custom_call.1} parent=0
    #allocation3 [shape = 'u8[8192]{0}', space=vmem, size = 0x2000, scoped, tag = 'input window, operand 0, single buffered']
    #allocation4 [shape = 's32[1]{0}', space=sflag, size = 0x4, scoped, tag = 'scoped memory for tpu_custom_call.1']
    #allocation5 [shape = 's32[1]{0}', space=sflag, size = 0x4, scoped, tag = 'scoped memory for tpu_custom_call.1']
    #allocation6 [shape = 'u8[8192]{0}', space=vmem, size = 0x2000, scoped, tag = 'input window, operand 1, single buffered']
    #allocation7 [shape = 's32[1]{0}', space=sflag, size = 0x4, scoped, tag = 'scoped memory for tpu_custom_call.1']
    #allocation8 [shape = 'u8[512]{0}', space=vmem, size = 0x400, scoped, tag = 'output window, operand 0, single buffered']
    %7 = vsyncpa [#allocation4], 0
    %8 = vsyncpa [#allocation7], 0
    %9 = vsyncpa [#allocation5], 0
    // Predicated region
    $region2: #{tpu_custom_call.1} parent=1 // pred_check
      _
    $region3: #{tpu_custom_call.1} parent=1 // pred_check_branch
      %11 = sbr.rel (0) target = $region5
    $region4: #{tpu_custom_call.1} parent=1 // pred_region
      %s12 = sadd.s32 0, 0
      %p13 = scmp.lt.s32.totalorder %s12, 0
      %s14 = scalar_select %p13, %s12, 0
      %s15 = smul.u32 2, %s14
      %s17 = ssub.s32 256, 256
      %18 = vsyncadd [#allocation4], %s17
      %s19 = smul.addr %s15, 128
      %s20 = scalar_lea.hbm %s0, %s19
      %s21 = sshll.u32 [#allocation3], 4
      %s22 = int_to_ptr.vmem [resolvable:$true] %s21
      %27 = dma.hbm_to_vmem [thread:$0]  %s20, 256, %s22, [#allocation4], 128, 128, 8
    $region5: #{tpu_custom_call.1} parent=1 // pred_fallthru
      _
    // Predicated region
    $region6: #{tpu_custom_call.1} parent=1 // pred_check
      _
    $region7: #{tpu_custom_call.1} parent=1 // pred_check_branch
      %29 = sbr.rel (0) target = $region9
    $region8: #{tpu_custom_call.1} parent=1 // pred_region
      %s30 = sadd.s32 0, 0
      %p31 = scmp.lt.s32.totalorder %s30, 0
      %s32 = scalar_select %p31, %s30, 0
      %s33 = smul.u32 2, %s32
      %s35 = ssub.s32 256, 256
      %36 = vsyncadd [#allocation7], %s35
      %s37 = smul.addr %s33, 128
      %s38 = scalar_lea.hbm %s1, %s37
      %s39 = sshll.u32 [#allocation6], 4
      %s40 = int_to_ptr.vmem [resolvable:$true] %s39
      %45 = dma.hbm_to_vmem [thread:$0]  %s38, 256, %s40, [#allocation7], 128, 128, 8
    $region9: #{tpu_custom_call.1} parent=1 // pred_fallthru
      _
    // Predicated region
    $region10: #{tpu_custom_call.1} parent=1 // pred_check
      _
    $region11: #{tpu_custom_call.1} parent=1 // pred_check_branch
      %47 = sbr.rel (0) target = $region13
    $region12: #{tpu_custom_call.1} parent=1 // pred_region
      %48 = dma.done [#allocation4], 256
    $region13: #{tpu_custom_call.1} parent=1 // pred_fallthru
      _
    // Predicated region
    $region14: #{tpu_custom_call.1} parent=1 // pred_check
      _
    $region15: #{tpu_custom_call.1} parent=1 // pred_check_branch
      %50 = sbr.rel (0) target = $region17
    $region16: #{tpu_custom_call.1} parent=1 // pred_region
      %51 = dma.done [#allocation7], 256
    $region17: #{tpu_custom_call.1} parent=1 // pred_fallthru
      _
    %s52 = sadd.s32 0, 0
    %p53 = scmp.lt.s32.totalorder %s52, 0
    %s54 = scalar_select %p53, %s52, 0
    %s55 = smul.u32 2, %s54
    %s56 = sadd.s32 0, 0
    %p57 = scmp.lt.s32.totalorder %s56, 0
    %s58 = scalar_select %p57, %s56, 0
    %s59 = smul.u32 2, %s58
    %p60 = scmp.eq.s32.totalorder 0, 0
    // Predicated region
    $region18: #{tpu_custom_call.1} parent=1 // pred_check
      %p61 = pneg %p60
    $region19: #{tpu_custom_call.1} parent=1 // pred_check_branch
      %63 = sbr.rel (%p61) target = $region21
    $region20: #{tpu_custom_call.1} parent=1 // pred_region
      %64 = vst [vmem:[#allocation2] sm:$0xff] 0.0
    $region21: #{tpu_custom_call.1} parent=1 // pred_fallthru
      _
    %v65 = vld [vmem:[#allocation3] sm:$0xff]
    %v66 = vld [vmem:[#allocation3 + $0x8] sm:$0xff]
    %v67 = vld [vmem:[#allocation6] sm:$0xff]
    %v68 = vld [vmem:[#allocation6 + $0x8] sm:$0xff]
    %v69 = vand.u32 2147483647, %v65
    %v70 = vand.u32 2147483647, %v66
    %v71 = vsub.f32 0.0, %v69
    %v72 = vsub.f32 0.0, %v70
    %v73 = vmul.f32 %v71, 1.442695
    %v74 = vpow.pop %v73
    %v75 = vmul.f32 %v72, 1.442695
    %v76 = vpow.pop %v75
    %v77 = vadd.f32 %v74, 1.0
    %v78 = vlog2.pop %v77
    %v79 = vmul.f32 %v78, 0.6931472
    %v80 = vmul.f32 -0.5, %v74
    %v81 = vadd.f32 %v80, 1.0
    %v82 = vmul.f32 %v81, %v74
    %v83 = vand.u32 2147483647, %v74
    %vm84 = vcmp.lt.f32.partialorder %v83, 0.0004427343
    %v85 = vsel %vm84, %v82, %v79
    %v86 = vadd.f32 %v76, 1.0
    %v87 = vlog2.pop %v86
    %v88 = vmul.f32 %v87, 0.6931472
    %v89 = vmul.f32 -0.5, %v76
    %v90 = vadd.f32 %v89, 1.0
    %v91 = vmul.f32 %v90, %v76
    %v92 = vand.u32 2147483647, %v76
    %vm93 = vcmp.lt.f32.partialorder %v92, 0.0004427343
    %v94 = vsel %vm93, %v91, %v88
    %v95 = vmul.f32 %v65, %v67
    %v96 = vmul.f32 %v66, %v68
    %v97 = vmax.f32 %v65, 0.0
    %v98 = vmax.f32 %v66, 0.0
    %v99 = vsub.f32 %v95, %v97
    %v100 = vsub.f32 %v96, %v98
    %v101 = vsub.f32 %v85, %v99
    %v102 = vsub.f32 %v94, %v100
    %v103 = vsub.f32 0.0, %v101
    %v104 = vsub.f32 0.0, %v102
    %v105 = vmul.f32 %v103, 1.442695
    %v106 = vpow.pop %v105
    %v107 = vmul.f32 %v104, 1.442695
    %v108 = vpow.pop %v107
    %v109 = vsub.f32 1.0, %v106
    %v110 = vsub.f32 1.0, %v108
    %v111 = vmul.f32 %v109, %v109
    %v112 = vmul.f32 %v110, %v110
    %v113 = vmul.f32 %v111, %v101
    %v114 = vmul.f32 %v112, %v102
    %v115 = vmul.f32 %v67, 0.25
    %v116 = vmul.f32 %v68, 0.25
    %v117 = vsub.f32 1.0, %v67
    %v118 = vsub.f32 1.0, %v68
    %v119 = vmul.f32 %v117, 0.75
    %v120 = vmul.f32 %v118, 0.75
    %v121 = vadd.f32 %v115, %v119
    %v122 = vadd.f32 %v116, %v120
    %v123 = vmul.f32 %v113, %v121
    %v124 = vmul.f32 %v114, %v122
    %v125 = vld [vmem:[#allocation2] sm:$0xff]
    %v126 = vadd.f32 %v123, %v124
    %v127 = vadd.f32 %v125, %v126
    %128 = vst [vmem:[#allocation2] sm:$0xff] %v127
    // Predicated region
    $region22: #{tpu_custom_call.1} parent=1 // pred_check
      %p129 = pneg %p60
    $region23: #{tpu_custom_call.1} parent=1 // pred_check_branch
      %131 = sbr.rel (%p129) target = $region25
    $region24: #{tpu_custom_call.1} parent=1 // pred_region
      %v132 = vld [vmem:[#allocation2] sm:$0xff]
      %133 = vadd.xlane.f32.xlu0 %v132
      %v134 = vpop.xlane.xlu0 %133
      %v135 = vrot.slane %v134, 4
      %v136 = vadd.f32 %v134, %v135
      %v137 = vrot.slane %v136, 2
      %v138 = vadd.f32 %v136, %v137
      %v139 = vrot.slane %v138, 1
      %v140 = vadd.f32 %v138, %v139
      %s141 = vtos %v140
      %v142 = vstv %s141
      %vm143 = vcmask 0
      %144 = vst.msk [vmem:[#allocation8] sm:$0x1] %vm143, %v142
    $region25: #{tpu_custom_call.1} parent=1 // pred_fallthru
      _
    // Predicated region
    $region26: #{tpu_custom_call.1} parent=1 // pred_check
      _
    $region27: #{tpu_custom_call.1} parent=1 // pred_check_branch
      %146 = sbr.rel (0) target = $region29
    $region28: #{tpu_custom_call.1} parent=1 // pred_region
      %s148 = ssub.s32 16, 16
      %149 = vsyncadd [#allocation5], %s148
      %s151 = sshll.u32 [#allocation8], 4
      %s152 = int_to_ptr.vmem [resolvable:$true] %s151
      %154 = dma.vmem_to_hbm [thread:$0]  %s152, 16, %s2, [#allocation5]
    $region29: #{tpu_custom_call.1} parent=1 // pred_fallthru
      _
    // Predicated region
    $region30: #{tpu_custom_call.1} parent=1 // pred_check
      _
    $region31: #{tpu_custom_call.1} parent=1 // pred_check_branch
      %156 = sbr.rel (0) target = $region33
    $region32: #{tpu_custom_call.1} parent=1 // pred_region
      %157 = dma.done [#allocation5], 16
    $region33: #{tpu_custom_call.1} parent=1 // pred_fallthru
      _
    %158 = vsyncpa [#allocation4], 1
    %159 = vsyncpa [#allocation7], 1
    %160 = vsyncpa [#allocation5], 1

</llo_original>
